<compile_context>
chip_gen: v5e
topology: v5e:2x2
jax: 0.10.0
libtpu: 0.0.40
codegen_flags: <defaults>
</compile_context>

<pallas_src>
import functools

import jax
import jax.numpy as jnp
from jax.experimental import pallas as pl
from jax.experimental.pallas import tpu as pltpu

HIDDEN = 32


def _pinn_kernel(scal_ref, data_ref, params_ref, loss_ref, *, n_int, n_init):
    """Computes [loss_init, loss_init_deriv, loss_f].

    scal_ref   : SMEM (2,)              [c, b3]
    data_ref   : VMEM (n_int+n_init, 8)
                   rows 0:n_int  -> [x, t, f, 0, 0,0,0,0]   (interior points)
                   rows n_int:   -> [x, t, g, g',0,0,0,0]   (initial points)
    params_ref : VMEM (8+H, H)
                   row 0: w1[0] (dz1/dx), row 1: w1[1] (dz1/dt),
                   rows 2,3,7: zero, row 4: b1, row 5: b2, row 6: w3,
                   rows 8: : w2
    loss_ref   : SMEM (3,)              [loss_init, loss_init_deriv, loss_f]
    """
    data = data_ref[...]
    params = params_ref[...]

    w1x = params[0:1, :]
    w1t = params[1:2, :]
    b1 = params[4:5, :]
    b2 = params[5:6, :]
    w3 = params[6:7, :]
    w2 = params[8:, :]
    c = scal_ref[0]
    b3 = scal_ref[1]

    # ---- layer 1: both batches in one (N,8)@(8,H) MXU push -----------------
    # Data columns 2.. multiply zero rows of params[0:8], so only x,t matter.
    z1 = jnp.dot(data, params[0:8, :], preferred_element_type=jnp.float32) + b1
    a1 = jnp.tanh(z1)
    s1 = 1.0 - a1 * a1                              # tanh'

    a1_int, a1_init = a1[:n_int], a1[n_int:]
    s1_int, s1_init = s1[:n_int], s1[n_int:]

    m1_int = -2.0 * a1_int * s1_int
    da1x_int = s1_int * w1x                         # z1' wrt x is the const w1x
    da1t_int = s1_int * w1t
    dda1x_int = m1_int * (w1x * w1x)                # z1'' == 0
    dda1t_int = m1_int * (w1t * w1t)
    da1t_init = s1_init * w1t                       # init batch needs u, u_t only

    # ---- layer 2: ONE stacked matmul against w2 -----------------------------
    stack = jnp.concatenate(
        [a1_int, a1_init,        # -> z2        (both batches)
         da1x_int,               # -> dz2/dx    (interior)
         da1t_int, da1t_init,    # -> dz2/dt    (interior, init)
         dda1x_int,              # -> d2z2/dx2  (interior)
         dda1t_int],             # -> d2z2/dt2  (interior)
        axis=0)                  # (5*n_int + 2*n_init, H)
    h = jnp.dot(stack, w2, preferred_element_type=jnp.float32)

    nb = n_int + n_init
    a2 = jnp.tanh(h[0:nb] + b2)                     # single EUP push, both batches
    s2 = 1.0 - a2 * a2
    a2_int, a2_init = a2[:n_int], a2[n_int:]
    s2_int, s2_init = s2[:n_int], s2[n_int:]

    o = nb
    dz2x_int = h[o:o + n_int]; o += n_int
    dz2t_int = h[o:o + n_int]; o += n_int
    dz2t_init = h[o:o + n_init]; o += n_init
    ddz2x_int = h[o:o + n_int]; o += n_int
    ddz2t_int = h[o:o + n_int]

    m2_int = -2.0 * a2_int * s2_int
    dda2x_int = m2_int * dz2x_int * dz2x_int + s2_int * ddz2x_int
    dda2t_int = m2_int * dz2t_int * dz2t_int + s2_int * ddz2t_int
    da2t_init = s2_init * dz2t_init

    # ---- output layer: a single lane reduction against w3 -------------------
    out_stack = jnp.concatenate(
        [a2_init, da2t_init, dda2x_int, dda2t_int], axis=0)   # (2*n_init+2*n_int, H)
    u_all = jnp.sum(out_stack * w3, axis=1, keepdims=True)

    u0 = u_all[0:n_init] + b3                       # u(x, 0)
    u0_t = u_all[n_init:2 * n_init]                 # u_t(x, 0)
    u_xx = u_all[2 * n_init:2 * n_init + n_int]
    u_tt = u_all[2 * n_init + n_int:]

    f = data[0:n_int, 2:3]
    g = data[n_int:, 2:3]
    g_deriv = data[n_int:, 3:4]

    resid = u_tt - (c * c) * u_xx - f
    loss_ref[0] = (0.5 / n_init) * jnp.sum((u0 - g) ** 2)
    loss_ref[1] = (0.5 / n_init) * jnp.sum((u0_t - g_deriv) ** 2)
    loss_ref[2] = (0.5 / n_int) * jnp.sum(resid * resid)


def wave_equation_pinn_forward(xt_int, f, xt_init, g, g_deriv, params):
    """Returns (loss_init, loss_init_deriv, loss_f), matching the torch module."""
    c, w1, b1, w2, b2, w3, b3 = params
    n_int = xt_int.shape[0]
    n_init = xt_init.shape[0]
    h = w1.shape[1]
    f32 = jnp.float32

    # Pack all collocation data into one lane-padded (n_int+n_init, 8) tile.
    data_int = jnp.concatenate([xt_int, f, jnp.zeros((n_int, 5), f32)], axis=1)
    data_init = jnp.concatenate(
        [xt_init, g, g_deriv, jnp.zeros((n_init, 4), f32)], axis=1)
    data = jnp.concatenate([data_int, data_init], axis=0).astype(f32)

    # Pack all weights into one (8+H, H) tile: 8-row aligned head, then w2.
    head = jnp.zeros((8, h), f32)
    head = head.at[0:2, :].set(w1.astype(f32))
    head = head.at[4, :].set(jnp.reshape(b1, (h,)).astype(f32))
    head = head.at[5, :].set(jnp.reshape(b2, (h,)).astype(f32))
    head = head.at[6, :].set(jnp.reshape(w3, (h,)).astype(f32))
    packed_params = jnp.concatenate([head, w2.astype(f32)], axis=0)

    scal = jnp.stack([jnp.reshape(jnp.asarray(c, f32), ()),
                      jnp.reshape(jnp.asarray(b3, f32), ())])

    kernel = functools.partial(_pinn_kernel, n_int=n_int, n_init=n_init)
    losses = pl.pallas_call(
        kernel,
        out_shape=jax.ShapeDtypeStruct((3,), f32),
        in_specs=[pl.BlockSpec(memory_space=pltpu.SMEM),   # [c, b3]
                  pl.BlockSpec(memory_space=pltpu.VMEM),   # packed data
                  pl.BlockSpec(memory_space=pltpu.VMEM)],  # packed params
        out_specs=pl.BlockSpec(memory_space=pltpu.SMEM),
    )(scal, data, packed_params)
    return losses[0], losses[1], losses[2]


def make_params(key, hidden=HIDDEN):
    ks = jax.random.split(key, 6)
    w1 = jax.random.normal(ks[0], (2, hidden), jnp.float32) / jnp.sqrt(2.0)
    b1 = 0.1 * jax.random.normal(ks[1], (1, hidden), jnp.float32)
    w2 = jax.random.normal(ks[2], (hidden, hidden), jnp.float32) / jnp.sqrt(float(hidden))
    b2 = 0.1 * jax.random.normal(ks[3], (1, hidden), jnp.float32)
    w3 = jax.random.normal(ks[4], (1, hidden), jnp.float32) / jnp.sqrt(float(hidden))
    b3 = 0.1 * jax.random.normal(ks[5], (1, 1), jnp.float32)
    c = jnp.float32(1.0)  # matches torch.nn.Parameter(torch.tensor(1))
    return (c, w1, b1, w2, b2, w3, b3)


def _reference(xt_int, f, xt_init, g, g_deriv, params):
    """Pure-JAX reference (same analytic forward-mode derivatives)."""
    c, w1, b1, w2, b2, w3, b3 = params
    hp = jax.lax.Precision.HIGHEST

    def net_with_derivs(xt):
        x, t = xt[:, 0:1], xt[:, 1:2]
        w1x, w1t = w1[0:1, :], w1[1:2, :]
        z1 = x * w1x + t * w1t + b1
        a1 = jnp.tanh(z1); s1 = 1.0 - a1 * a1
        da1x, da1t = s1 * w1x, s1 * w1t
        dda1x = -2.0 * a1 * s1 * w1x * w1x
        dda1t = -2.0 * a1 * s1 * w1t * w1t
        z2 = jnp.dot(a1, w2, precision=hp) + b2
        dz2x = jnp.dot(da1x, w2, precision=hp)
        dz2t = jnp.dot(da1t, w2, precision=hp)
        ddz2x = jnp.dot(dda1x, w2, precision=hp)
        ddz2t = jnp.dot(dda1t, w2, precision=hp)
        a2 = jnp.tanh(z2); s2 = 1.0 - a2 * a2
        da2t = s2 * dz2t
        dda2x = -2.0 * a2 * s2 * dz2x * dz2x + s2 * ddz2x
        dda2t = -2.0 * a2 * s2 * dz2t * dz2t + s2 * ddz2t
        u = jnp.sum(a2 * w3, axis=1, keepdims=True) + b3
        u_t = jnp.sum(da2t * w3, axis=1, keepdims=True)
        u_xx = jnp.sum(dda2x * w3, axis=1, keepdims=True)
        u_tt = jnp.sum(dda2t * w3, axis=1, keepdims=True)
        return u, u_t, u_xx, u_tt

    n_init, n_int = xt_init.shape[0], xt_int.shape[0]
    u0, u0_t, _, _ = net_with_derivs(xt_init)
    _, _, u_xx, u_tt = net_with_derivs(xt_int)
    loss_init = 0.5 / n_init * jnp.sum((u0 - g) ** 2)
    loss_init_deriv = 0.5 / n_init * jnp.sum((u0_t - g_deriv) ** 2)
    loss_f = 0.5 / n_int * jnp.sum((u_tt - c * c * u_xx - f) ** 2)
    return loss_init, loss_init_deriv, loss_f


if __name__ == "__main__":
    key = jax.random.PRNGKey(0)
    kp, k1, k2, k3, k4, k5 = jax.random.split(key, 6)

    n_int, n_init = 32, 16
    params = make_params(kp)

    xt_int = jax.random.uniform(k1, (n_int, 2), jnp.float32)
    f = jax.random.normal(k2, (n_int, 1), jnp.float32)
    xt_init = jnp.concatenate(
        [jax.random.uniform(k3, (n_init, 1), jnp.float32),
         jnp.zeros((n_init, 1), jnp.float32)], axis=1)   # t = 0 at init points
    g = jax.random.normal(k4, (n_init, 1), jnp.float32)
    g_deriv = jax.random.normal(k5, (n_init, 1), jnp.float32)

    losses = jax.jit(wave_equation_pinn_forward)(xt_int, f, xt_init, g, g_deriv, params)
    losses = jax.block_until_ready(losses)

    want = _reference(xt_int, f, xt_init, g, g_deriv, params)
    for got_v, want_v in zip(losses, want):
        got_v, want_v = float(got_v), float(want_v)
        assert abs(got_v - want_v) <= 1e-3 * max(1.0, abs(want_v)), (got_v, want_v)

    print("KERNEL_OK")
</pallas_src>

<mosaic_0001>
module attributes {stable_mosaic.version = 11 : i64} {
  func.func @_pinn_kernel(%arg0: memref<2xf32, #tpu.memory_space<smem>>, %arg1: memref<48x8xf32, #tpu.memory_space<vmem>>, %arg2: memref<40x32xf32, #tpu.memory_space<vmem>>, %arg3: memref<3xf32, #tpu.memory_space<smem>>) attributes {dimension_semantics = [], scalar_prefetch = 0 : i64, scratch_operands = 0 : i64, tpu.core_type = #tpu.core_type<tc>} {
    %c0 = arith.constant 0 : index
    %c0_0 = arith.constant 0 : index
    %0 = vector.load %arg1[%c0, %c0_0] : memref<48x8xf32, #tpu.memory_space<vmem>>, vector<48x8xf32>
    %c0_1 = arith.constant 0 : index
    %c0_2 = arith.constant 0 : index
    %1 = vector.load %arg2[%c0_1, %c0_2] : memref<40x32xf32, #tpu.memory_space<vmem>>, vector<40x32xf32>
    %2 = vector.extract_strided_slice %1 {offsets = [0, 0], sizes = [1, 32], strides = [1, 1]} : vector<40x32xf32> to vector<1x32xf32>
    %3 = vector.extract_strided_slice %1 {offsets = [1, 0], sizes = [1, 32], strides = [1, 1]} : vector<40x32xf32> to vector<1x32xf32>
    %4 = vector.extract_strided_slice %1 {offsets = [4, 0], sizes = [1, 32], strides = [1, 1]} : vector<40x32xf32> to vector<1x32xf32>
    %5 = vector.extract_strided_slice %1 {offsets = [5, 0], sizes = [1, 32], strides = [1, 1]} : vector<40x32xf32> to vector<1x32xf32>
    %6 = vector.extract_strided_slice %1 {offsets = [6, 0], sizes = [1, 32], strides = [1, 1]} : vector<40x32xf32> to vector<1x32xf32>
    %7 = vector.extract_strided_slice %1 {offsets = [8, 0], sizes = [32, 32], strides = [1, 1]} : vector<40x32xf32> to vector<32x32xf32>
    %c0_3 = arith.constant 0 : index
    %8 = memref.load %arg0[%c0_3] : memref<2xf32, #tpu.memory_space<smem>>
    %c1 = arith.constant 1 : index
    %9 = memref.load %arg0[%c1] : memref<2xf32, #tpu.memory_space<smem>>
    %10 = vector.extract_strided_slice %1 {offsets = [0, 0], sizes = [8, 32], strides = [1, 1]} : vector<40x32xf32> to vector<8x32xf32>
    %cst = arith.constant dense<0.000000e+00> : vector<48x32xf32>
    %11 = tpu.matmul %0, %10, %cst {dimension_numbers = #tpu.dot_dimension_numbers<[1], [0], [0], [1], [0, 0, 1, 1], [], []>} : vector<48x8xf32>, vector<8x32xf32>, vector<48x32xf32> -> vector<48x32xf32>
    %12 = vector.broadcast %4 : vector<1x32xf32> to vector<48x32xf32>
    %13 = arith.addf %11, %12 : vector<48x32xf32>
    %14 = math.tanh %13 : vector<48x32xf32>
    %15 = arith.mulf %14, %14 : vector<48x32xf32>
    %cst_4 = arith.constant 1.000000e+00 : f32
    %16 = vector.broadcast %cst_4 : f32 to vector<48x32xf32>
    %17 = arith.subf %16, %15 : vector<48x32xf32>
    %18 = vector.extract_strided_slice %14 {offsets = [0, 0], sizes = [32, 32], strides = [1, 1]} : vector<48x32xf32> to vector<32x32xf32>
    %19 = vector.extract_strided_slice %14 {offsets = [32, 0], sizes = [16, 32], strides = [1, 1]} : vector<48x32xf32> to vector<16x32xf32>
    %20 = vector.extract_strided_slice %17 {offsets = [0, 0], sizes = [32, 32], strides = [1, 1]} : vector<48x32xf32> to vector<32x32xf32>
    %21 = vector.extract_strided_slice %17 {offsets = [32, 0], sizes = [16, 32], strides = [1, 1]} : vector<48x32xf32> to vector<16x32xf32>
    %cst_5 = arith.constant -2.000000e+00 : f32
    %22 = vector.broadcast %cst_5 : f32 to vector<32x32xf32>
    %23 = arith.mulf %22, %18 : vector<32x32xf32>
    %24 = arith.mulf %23, %20 : vector<32x32xf32>
    %25 = vector.broadcast %2 : vector<1x32xf32> to vector<32x32xf32>
    %26 = arith.mulf %20, %25 : vector<32x32xf32>
    %27 = vector.broadcast %3 : vector<1x32xf32> to vector<32x32xf32>
    %28 = arith.mulf %20, %27 : vector<32x32xf32>
    %29 = arith.mulf %2, %2 : vector<1x32xf32>
    %30 = vector.broadcast %29 : vector<1x32xf32> to vector<32x32xf32>
    %31 = arith.mulf %24, %30 : vector<32x32xf32>
    %32 = arith.mulf %3, %3 : vector<1x32xf32>
    %33 = vector.broadcast %32 : vector<1x32xf32> to vector<32x32xf32>
    %34 = arith.mulf %24, %33 : vector<32x32xf32>
    %35 = vector.broadcast %3 : vector<1x32xf32> to vector<16x32xf32>
    %36 = arith.mulf %21, %35 : vector<16x32xf32>
    %37 = tpu.concatenate %18, %19, %26, %28, %36, %31, %34 in 0 : vector<32x32xf32>, vector<16x32xf32>, vector<32x32xf32>, vector<32x32xf32>, vector<16x32xf32>, vector<32x32xf32>, vector<32x32xf32> -> vector<192x32xf32>
    %cst_6 = arith.constant dense<0.000000e+00> : vector<192x32xf32>
    %38 = tpu.matmul %37, %7, %cst_6 {dimension_numbers = #tpu.dot_dimension_numbers<[1], [0], [0], [1], [0, 0, 1, 1], [], []>} : vector<192x32xf32>, vector<32x32xf32>, vector<192x32xf32> -> vector<192x32xf32>
    %39 = vector.extract_strided_slice %38 {offsets = [0, 0], sizes = [48, 32], strides = [1, 1]} : vector<192x32xf32> to vector<48x32xf32>
    %40 = vector.broadcast %5 : vector<1x32xf32> to vector<48x32xf32>
    %41 = arith.addf %39, %40 : vector<48x32xf32>
    %42 = math.tanh %41 : vector<48x32xf32>
    %43 = arith.mulf %42, %42 : vector<48x32xf32>
    %cst_7 = arith.constant 1.000000e+00 : f32
    %44 = vector.broadcast %cst_7 : f32 to vector<48x32xf32>
    %45 = arith.subf %44, %43 : vector<48x32xf32>
    %46 = vector.extract_strided_slice %42 {offsets = [0, 0], sizes = [32, 32], strides = [1, 1]} : vector<48x32xf32> to vector<32x32xf32>
    %47 = vector.extract_strided_slice %42 {offsets = [32, 0], sizes = [16, 32], strides = [1, 1]} : vector<48x32xf32> to vector<16x32xf32>
    %48 = vector.extract_strided_slice %45 {offsets = [0, 0], sizes = [32, 32], strides = [1, 1]} : vector<48x32xf32> to vector<32x32xf32>
    %49 = vector.extract_strided_slice %45 {offsets = [32, 0], sizes = [16, 32], strides = [1, 1]} : vector<48x32xf32> to vector<16x32xf32>
    %50 = vector.extract_strided_slice %38 {offsets = [48, 0], sizes = [32, 32], strides = [1, 1]} : vector<192x32xf32> to vector<32x32xf32>
    %51 = vector.extract_strided_slice %38 {offsets = [80, 0], sizes = [32, 32], strides = [1, 1]} : vector<192x32xf32> to vector<32x32xf32>
    %52 = vector.extract_strided_slice %38 {offsets = [112, 0], sizes = [16, 32], strides = [1, 1]} : vector<192x32xf32> to vector<16x32xf32>
    %53 = vector.extract_strided_slice %38 {offsets = [128, 0], sizes = [32, 32], strides = [1, 1]} : vector<192x32xf32> to vector<32x32xf32>
    %54 = vector.extract_strided_slice %38 {offsets = [160, 0], sizes = [32, 32], strides = [1, 1]} : vector<192x32xf32> to vector<32x32xf32>
    %cst_8 = arith.constant -2.000000e+00 : f32
    %55 = vector.broadcast %cst_8 : f32 to vector<32x32xf32>
    %56 = arith.mulf %55, %46 : vector<32x32xf32>
    %57 = arith.mulf %56, %48 : vector<32x32xf32>
    %58 = arith.mulf %57, %50 : vector<32x32xf32>
    %59 = arith.mulf %58, %50 : vector<32x32xf32>
    %60 = arith.mulf %48, %53 : vector<32x32xf32>
    %61 = arith.addf %59, %60 : vector<32x32xf32>
    %62 = arith.mulf %57, %51 : vector<32x32xf32>
    %63 = arith.mulf %62, %51 : vector<32x32xf32>
    %64 = arith.mulf %48, %54 : vector<32x32xf32>
    %65 = arith.addf %63, %64 : vector<32x32xf32>
    %66 = arith.mulf %49, %52 : vector<16x32xf32>
    %67 = tpu.concatenate %47, %66, %61, %65 in 0 : vector<16x32xf32>, vector<16x32xf32>, vector<32x32xf32>, vector<32x32xf32> -> vector<96x32xf32>
    %68 = vector.broadcast %6 : vector<1x32xf32> to vector<96x32xf32>
    %69 = arith.mulf %67, %68 : vector<96x32xf32>
    %cst_9 = arith.constant dense<0.000000e+00> : vector<96xf32>
    %70 = vector.multi_reduction <add>, %69, %cst_9 [1] : vector<96x32xf32> to vector<96xf32>
    %71 = vector.shape_cast %70 : vector<96xf32> to vector<96x1xf32>
    %72 = vector.extract_strided_slice %71 {offsets = [0, 0], sizes = [16, 1], strides = [1, 1]} : vector<96x1xf32> to vector<16x1xf32>
    %73 = vector.broadcast %9 : f32 to vector<16x1xf32>
    %74 = arith.addf %72, %73 : vector<16x1xf32>
    %75 = vector.extract_strided_slice %71 {offsets = [16, 0], sizes = [16, 1], strides = [1, 1]} : vector<96x1xf32> to vector<16x1xf32>
    %76 = vector.extract_strided_slice %71 {offsets = [32, 0], sizes = [32, 1], strides = [1, 1]} : vector<96x1xf32> to vector<32x1xf32>
    %77 = vector.extract_strided_slice %71 {offsets = [64, 0], sizes = [32, 1], strides = [1, 1]} : vector<96x1xf32> to vector<32x1xf32>
    %78 = vector.extract_strided_slice %0 {offsets = [0, 2], sizes = [32, 1], strides = [1, 1]} : vector<48x8xf32> to vector<32x1xf32>
    %79 = vector.extract_strided_slice %0 {offsets = [32, 2], sizes = [16, 1], strides = [1, 1]} : vector<48x8xf32> to vector<16x1xf32>
    %80 = vector.extract_strided_slice %0 {offsets = [32, 3], sizes = [16, 1], strides = [1, 1]} : vector<48x8xf32> to vector<16x1xf32>
    %81 = arith.mulf %8, %8 : f32
    %82 = vector.broadcast %81 : f32 to vector<32x1xf32>
    %83 = arith.mulf %82, %76 : vector<32x1xf32>
    %84 = arith.subf %77, %83 : vector<32x1xf32>
    %85 = arith.subf %84, %78 : vector<32x1xf32>
    %86 = arith.subf %74, %79 : vector<16x1xf32>
    %87 = arith.mulf %86, %86 : vector<16x1xf32>
    %88 = vector.shape_cast %87 : vector<16x1xf32> to vector<1x16x1xf32>
    %cst_10 = arith.constant dense<0.000000e+00> : vector<1xf32>
    %89 = vector.multi_reduction <add>, %88, %cst_10 [1, 2] : vector<1x16x1xf32> to vector<1xf32>
    %90 = vector.shape_cast %89 : vector<1xf32> to vector<1x1x1xf32>
    %91 = vector.extract %90[0, 0, 0] : f32 from vector<1x1x1xf32>
    %cst_11 = arith.constant 3.125000e-02 : f32
    %92 = arith.mulf %cst_11, %91 : f32
    %c0_12 = arith.constant 0 : index
    %93 = memref.load %arg3[%c0_12] : memref<3xf32, #tpu.memory_space<smem>>
    memref.store %92, %arg3[%c0_12] : memref<3xf32, #tpu.memory_space<smem>>
    %94 = arith.subf %75, %80 : vector<16x1xf32>
    %95 = arith.mulf %94, %94 : vector<16x1xf32>
    %96 = vector.shape_cast %95 : vector<16x1xf32> to vector<1x16x1xf32>
    %cst_13 = arith.constant dense<0.000000e+00> : vector<1xf32>
    %97 = vector.multi_reduction <add>, %96, %cst_13 [1, 2] : vector<1x16x1xf32> to vector<1xf32>
    %98 = vector.shape_cast %97 : vector<1xf32> to vector<1x1x1xf32>
    %99 = vector.extract %98[0, 0, 0] : f32 from vector<1x1x1xf32>
    %cst_14 = arith.constant 3.125000e-02 : f32
    %100 = arith.mulf %cst_14, %99 : f32
    %c1_15 = arith.constant 1 : index
    %101 = memref.load %arg3[%c1_15] : memref<3xf32, #tpu.memory_space<smem>>
    memref.store %100, %arg3[%c1_15] : memref<3xf32, #tpu.memory_space<smem>>
    %102 = arith.mulf %85, %85 : vector<32x1xf32>
    %103 = vector.shape_cast %102 : vector<32x1xf32> to vector<1x32x1xf32>
    %cst_16 = arith.constant dense<0.000000e+00> : vector<1xf32>
    %104 = vector.multi_reduction <add>, %103, %cst_16 [1, 2] : vector<1x32x1xf32> to vector<1xf32>
    %105 = vector.shape_cast %104 : vector<1xf32> to vector<1x1x1xf32>
    %106 = vector.extract %105[0, 0, 0] : f32 from vector<1x1x1xf32>
    %cst_17 = arith.constant 1.562500e-02 : f32
    %107 = arith.mulf %cst_17, %106 : f32
    %c2 = arith.constant 2 : index
    %108 = memref.load %arg3[%c2] : memref<3xf32, #tpu.memory_space<smem>>
    memref.store %107, %arg3[%c2] : memref<3xf32, #tpu.memory_space<smem>>
    return
  }
}

</mosaic_0001>

<llo_original>
// kernel: wave_equation_pinn_forward.1
$region0: #{wave_equation_pinn_forward.1}
  #allocation0 [shape = 'u32[]', space=smem, size = 0x4, offset = 0x4, fixed_abs, tag = 'smem constant byte address 0x4 - core index']
  #allocation1 [shape = 'u32[72,128]{1,0:T(1,128)}', space=vmem, size = 0x9000, scoped, tag = 'internal scratch']
  %s0 = inlined_call_operand.vmem [shape: f32[2], index: 0, kind: input, shape index: {}]
  %s1 = inlined_call_operand.vmem [shape: f32[48,8], index: 1, kind: input, shape index: {}]
  %s2 = inlined_call_operand.vmem [shape: f32[40,32], index: 2, kind: input, shape index: {}]
  %s3 = inlined_call_operand.vmem [shape: f32[3], index: 3, kind: output, shape index: {}]
  %s4 = sld [smem:[#allocation0]]
  $region26: #{wave_equation_pinn_forward.1} parent=0
    _
  %s6 = ssub.s32 1, %s4
  %s7 = scalar_select 0, %s6, %s4
  $region1: #{wave_equation_pinn_forward.1} parent=0
    #allocation2 [shape = 'u8[512]{0}', space=smem, size = 0x200, scoped, tag = 'input window, operand 0, single buffered']
    #allocation3 [shape = 's32[1]{0}', space=sflag, size = 0x4, scoped, tag = 'scoped memory for wave_equation_pinn_forward.1']
    #allocation4 [shape = 's32[1]{0}', space=sflag, size = 0x4, scoped, tag = 'scoped memory for wave_equation_pinn_forward.1']
    #allocation5 [shape = 'u8[512]{0}', space=smem, size = 0x200, scoped, tag = 'output window, operand 0, single buffered']
    %8 = vsyncpa [#allocation3], 0
    %9 = vsyncpa [#allocation4], 0
    // Predicated region
    $region2: #{wave_equation_pinn_forward.1} parent=1 // pred_check
      _
    $region3: #{wave_equation_pinn_forward.1} parent=1 // pred_check_branch
      %11 = sbr.rel (0) target = $region5
    $region4: #{wave_equation_pinn_forward.1} parent=1 // pred_region
      %13 = vsyncadd [#allocation3], 0
      %s15 = sshll.u32 %s0, 4
      %s16 = int_to_ptr.vmem [resolvable:$true] %s15
      %18 = dma.vmem_to_smem %s16, 16, [#allocation2], [#allocation3]
    $region5: #{wave_equation_pinn_forward.1} parent=1 // pred_fallthru
      _
    // Predicated region
    $region6: #{wave_equation_pinn_forward.1} parent=1 // pred_check
      _
    $region7: #{wave_equation_pinn_forward.1} parent=1 // pred_check_branch
      %20 = sbr.rel (0) target = $region9
    $region8: #{wave_equation_pinn_forward.1} parent=1 // pred_region
      _
    $region9: #{wave_equation_pinn_forward.1} parent=1 // pred_fallthru
      _
    // Predicated region
    $region10: #{wave_equation_pinn_forward.1} parent=1 // pred_check
      _
    $region11: #{wave_equation_pinn_forward.1} parent=1 // pred_check_branch
      %22 = sbr.rel (0) target = $region13
    $region12: #{wave_equation_pinn_forward.1} parent=1 // pred_region
      _
    $region13: #{wave_equation_pinn_forward.1} parent=1 // pred_fallthru
      _
    // Predicated region
    $region14: #{wave_equation_pinn_forward.1} parent=1 // pred_check
      _
    $region15: #{wave_equation_pinn_forward.1} parent=1 // pred_check_branch
      %24 = sbr.rel (0) target = $region17
    $region16: #{wave_equation_pinn_forward.1} parent=1 // pred_region
      %26 = dma.done [#allocation3], 16
    $region17: #{wave_equation_pinn_forward.1} parent=1 // pred_fallthru
      _
    %27 = sfence
    %v28 = vld [vmem:[%s1] sm:$0xff]
    %v29 = vld [vmem:[%s1 + $0x8] sm:$0xff]
    %v30 = vld [vmem:[%s1 + $0x10] sm:$0xff]
    %v31 = vld [vmem:[%s1 + $0x18] sm:$0xff]
    %v32 = vld [vmem:[%s1 + $0x20] sm:$0xff]
    %v33 = vld [vmem:[%s1 + $0x28] sm:$0xff]
    %v34 = vld [vmem:[%s2] sm:$0xff]
    %v35 = vld [vmem:[%s2 + $0x8] sm:$0xff]
    %v36 = vld [vmem:[%s2 + $0x10] sm:$0xff]
    %v37 = vld [vmem:[%s2 + $0x18] sm:$0xff]
    %v38 = vld [vmem:[%s2 + $0x20] sm:$0xff]
    %s39 = sld [smem:[#allocation2]]
    %s40 = sld [smem:[#allocation2 + $0x1]]
    %v41 = vperm.slane %v34, 4
    %vm42 = vcmask 64512
    %v44 = vsel %vm42, %v28, 0
    %v47 = vsel %vm42, %v29, 0
    %v50 = vsel %vm42, %v30, 0
    %v53 = vsel %vm42, %v31, 0
    %v56 = vsel %vm42, %v32, 0
    %v59 = vsel %vm42, %v33, 0
    %61 = vmatpush.msra.mxu0 0.0
    %62 = vmatpush.msra.mxu0 0.0
    %63 = vmatpush.msra.mxu0 0.0
    %64 = vmatpush.msra.mxu0 0.0
    %65 = vmatpush.msra.mxu0 0.0
    %66 = vmatpush.msra.mxu0 0.0
    %67 = vmatpush.msra.mxu0 0.0
    %68 = vmatpush.msra.mxu0 0.0
    %69 = vmatpush.msra.mxu0 0.0
    %70 = vmatpush.msra.mxu0 0.0
    %71 = vmatpush.msra.mxu0 0.0
    %72 = vmatpush.msra.mxu0 0.0
    %73 = vmatpush.msra.mxu0 0.0
    %74 = vmatpush.msra.mxu0 0.0
    %75 = vmatpush.msra.mxu0 0.0
    %76 = vmatpush.msra.mxu0 %v34
    %77 = vmatmul.f32.gmra.mxu0 %v44
    %v78 = vpop.f32.mrf.mxu0
    %v79 = vadd.f32 %v41, %v78
    %80 = vmatmul.f32.gmra.mxu0 %v47
    %v81 = vpop.f32.mrf.mxu0
    %v82 = vadd.f32 %v41, %v81
    %83 = vmatmul.f32.gmra.mxu0 %v50
    %v84 = vpop.f32.mrf.mxu0
    %v85 = vadd.f32 %v41, %v84
    %86 = vmatmul.f32.gmra.mxu0 %v53
    %v87 = vpop.f32.mrf.mxu0
    %v88 = vadd.f32 %v41, %v87
    %89 = vmatmul.f32.gmra.mxu0 %v56
    %v90 = vpop.f32.mrf.mxu0
    %v91 = vadd.f32 %v41, %v90
    %92 = vmatmul.f32.gmra.mxu0 %v59
    %v93 = vpop.f32.mrf.mxu0
    %v94 = vadd.f32 %v41, %v93
    %95 = vdwg.mxu0
    %v96 = vtanh.pop %v79
    %v97 = vtanh.pop %v82
    %v98 = vtanh.pop %v85
    %v99 = vtanh.pop %v88
    %v100 = vtanh.pop %v91
    %v101 = vtanh.pop %v94
    %v102 = vmul.f32 %v96, %v96
    %v103 = vmul.f32 %v97, %v97
    %v104 = vmul.f32 %v98, %v98
    %v105 = vmul.f32 %v99, %v99
    %v106 = vmul.f32 %v100, %v100
    %v107 = vmul.f32 %v101, %v101
    %v108 = vsub.f32 1.0, %v102
    %v109 = vsub.f32 1.0, %v103
    %v110 = vsub.f32 1.0, %v104
    %v111 = vsub.f32 1.0, %v105
    %v112 = vsub.f32 1.0, %v106
    %v113 = vsub.f32 1.0, %v107
    %v114 = vmul.f32 %v96, -2.0
    %v115 = vmul.f32 %v97, -2.0
    %v116 = vmul.f32 %v98, -2.0
    %v117 = vmul.f32 %v99, -2.0
    %v118 = vmul.f32 %v114, %v108
    %v119 = vmul.f32 %v115, %v109
    %v120 = vmul.f32 %v116, %v110
    %v121 = vmul.f32 %v117, %v111
    %v122 = vperm.slane %v34, 0
    %v123 = vmul.f32 %v108, %v122
    %v124 = vmul.f32 %v109, %v122
    %v125 = vmul.f32 %v110, %v122
    %v126 = vmul.f32 %v111, %v122
    %v127 = vperm.slane %v34, 1
    %v128 = vmul.f32 %v108, %v127
    %v129 = vmul.f32 %v109, %v127
    %v130 = vmul.f32 %v110, %v127
    %v131 = vmul.f32 %v111, %v127
    %v132 = vmul.f32 %v34, %v34
    %v133 = vperm.slane %v132, 0
    %v134 = vmul.f32 %v118, %v133
    %v135 = vmul.f32 %v119, %v133
    %v136 = vmul.f32 %v120, %v133
    %v137 = vmul.f32 %v121, %v133
    %v138 = vperm.slane %v132, 1
    %v139 = vmul.f32 %v118, %v138
    %v140 = vmul.f32 %v119, %v138
    %v141 = vmul.f32 %v120, %v138
    %v142 = vmul.f32 %v121, %v138
    %v143 = vmul.f32 %v112, %v127
    %v144 = vmul.f32 %v113, %v127
    %vm145 = vcmask 261120
    %v147 = vsel %vm145, %v96, 0
    %v150 = vsel %vm145, %v97, 0
    %v153 = vsel %vm145, %v98, 0
    %v156 = vsel %vm145, %v99, 0
    %v159 = vsel %vm145, %v100, 0
    %v162 = vsel %vm145, %v101, 0
    %v165 = vsel %vm145, %v123, 0
    %v168 = vsel %vm145, %v124, 0
    %v171 = vsel %vm145, %v125, 0
    %v174 = vsel %vm145, %v126, 0
    %v177 = vsel %vm145, %v128, 0
    %v180 = vsel %vm145, %v129, 0
    %v183 = vsel %vm145, %v130, 0
    %v186 = vsel %vm145, %v131, 0
    %v189 = vsel %vm145, %v143, 0
    %v192 = vsel %vm145, %v144, 0
    %v195 = vsel %vm145, %v134, 0
    %v198 = vsel %vm145, %v135, 0
    %v201 = vsel %vm145, %v136, 0
    %v204 = vsel %vm145, %v137, 0
    %v207 = vsel %vm145, %v139, 0
    %v210 = vsel %vm145, %v140, 0
    %v213 = vsel %vm145, %v141, 0
    %v216 = vsel %vm145, %v142, 0
    %218 = vmatpush.msra.mxu0 0.0
    %219 = vmatpush.msra.mxu0 0.0
    %220 = vmatpush.msra.mxu0 0.0
    %221 = vmatpush.msra.mxu0 0.0
    %222 = vmatpush.msra.mxu0 0.0
    %223 = vmatpush.msra.mxu0 0.0
    %224 = vmatpush.msra.mxu0 0.0
    %225 = vmatpush.msra.mxu0 0.0
    %226 = vmatpush.msra.mxu0 0.0
    %227 = vmatpush.msra.mxu0 0.0
    %228 = vmatpush.msra.mxu0 0.0
    %229 = vmatpush.msra.mxu0 0.0
    %230 = vmatpush.msra.mxu0 %v38
    %231 = vmatpush.msra.mxu0 %v37
    %232 = vmatpush.msra.mxu0 %v36
    %233 = vmatpush.msra.mxu0 %v35
    %234 = vmatmul.f32.gmra.mxu0 %v147
    %v235 = vpop.f32.mrf.mxu0
    %v236 = vadd.f32 0.0, %v235
    %237 = vmatmul.f32.gmra.mxu0 %v150
    %v238 = vpop.f32.mrf.mxu0
    %v239 = vadd.f32 0.0, %v238
    %240 = vmatmul.f32.gmra.mxu0 %v153
    %v241 = vpop.f32.mrf.mxu0
    %v242 = vadd.f32 0.0, %v241
    %243 = vmatmul.f32.gmra.mxu0 %v156
    %v244 = vpop.f32.mrf.mxu0
    %v245 = vadd.f32 0.0, %v244
    %246 = vmatmul.f32.gmra.mxu0 %v159
    %v247 = vpop.f32.mrf.mxu0
    %v248 = vadd.f32 0.0, %v247
    %249 = vmatmul.f32.gmra.mxu0 %v162
    %v250 = vpop.f32.mrf.mxu0
    %v251 = vadd.f32 0.0, %v250
    %252 = vmatmul.f32.gmra.mxu0 %v165
    %v253 = vpop.f32.mrf.mxu0
    %v254 = vadd.f32 0.0, %v253
    %255 = vmatmul.f32.gmra.mxu0 %v168
    %v256 = vpop.f32.mrf.mxu0
    %v257 = vadd.f32 0.0, %v256
    %258 = vmatmul.f32.gmra.mxu0 %v171
    %v259 = vpop.f32.mrf.mxu0
    %v260 = vadd.f32 0.0, %v259
    %261 = vmatmul.f32.gmra.mxu0 %v174
    %v262 = vpop.f32.mrf.mxu0
    %v263 = vadd.f32 0.0, %v262
    %264 = vmatmul.f32.gmra.mxu0 %v177
    %v265 = vpop.f32.mrf.mxu0
    %v266 = vadd.f32 0.0, %v265
    %267 = vmatmul.f32.gmra.mxu0 %v180
    %v268 = vpop.f32.mrf.mxu0
    %v269 = vadd.f32 0.0, %v268
    %270 = vmatmul.f32.gmra.mxu0 %v183
    %v271 = vpop.f32.mrf.mxu0
    %v272 = vadd.f32 0.0, %v271
    %273 = vmatmul.f32.gmra.mxu0 %v186
    %v274 = vpop.f32.mrf.mxu0
    %v275 = vadd.f32 0.0, %v274
    %276 = vmatmul.f32.gmra.mxu0 %v189
    %v277 = vpop.f32.mrf.mxu0
    %v278 = vadd.f32 0.0, %v277
    %279 = vmatmul.f32.gmra.mxu0 %v192
    %v280 = vpop.f32.mrf.mxu0
    %v281 = vadd.f32 0.0, %v280
    %282 = vmatmul.f32.gmra.mxu0 %v195
    %v283 = vpop.f32.mrf.mxu0
    %v284 = vadd.f32 0.0, %v283
    %285 = vmatmul.f32.gmra.mxu0 %v198
    %v286 = vpop.f32.mrf.mxu0
    %v287 = vadd.f32 0.0, %v286
    %288 = vmatmul.f32.gmra.mxu0 %v201
    %v289 = vpop.f32.mrf.mxu0
    %v290 = vadd.f32 0.0, %v289
    %291 = vmatmul.f32.gmra.mxu0 %v204
    %v292 = vpop.f32.mrf.mxu0
    %v293 = vadd.f32 0.0, %v292
    %294 = vmatmul.f32.gmra.mxu0 %v207
    %v295 = vpop.f32.mrf.mxu0
    %v296 = vadd.f32 0.0, %v295
    %297 = vmatmul.f32.gmra.mxu0 %v210
    %v298 = vpop.f32.mrf.mxu0
    %v299 = vadd.f32 0.0, %v298
    %300 = vmatmul.f32.gmra.mxu0 %v213
    %v301 = vpop.f32.mrf.mxu0
    %v302 = vadd.f32 0.0, %v301
    %303 = vmatmul.f32.gmra.mxu0 %v216
    %v304 = vpop.f32.mrf.mxu0
    %v305 = vadd.f32 0.0, %v304
    %306 = vdwg.mxu0
    %v307 = vperm.slane %v34, 5
    %v308 = vadd.f32 %v236, %v307
    %v309 = vadd.f32 %v239, %v307
    %v310 = vadd.f32 %v242, %v307
    %v311 = vadd.f32 %v245, %v307
    %v312 = vadd.f32 %v248, %v307
    %v313 = vadd.f32 %v251, %v307
    %v314 = vtanh.pop %v308
    %v315 = vtanh.pop %v309
    %v316 = vtanh.pop %v310
    %v317 = vtanh.pop %v311
    %v318 = vtanh.pop %v312
    %v319 = vtanh.pop %v313
    %v320 = vmul.f32 %v314, %v314
    %v321 = vmul.f32 %v315, %v315
    %v322 = vmul.f32 %v316, %v316
    %v323 = vmul.f32 %v317, %v317
    %v324 = vmul.f32 %v318, %v318
    %v325 = vmul.f32 %v319, %v319
    %v326 = vsub.f32 1.0, %v320
    %v327 = vsub.f32 1.0, %v321
    %v328 = vsub.f32 1.0, %v322
    %v329 = vsub.f32 1.0, %v323
    %v330 = vsub.f32 1.0, %v324
    %v331 = vsub.f32 1.0, %v325
    %v332 = vmul.f32 %v314, -2.0
    %v333 = vmul.f32 %v315, -2.0
    %v334 = vmul.f32 %v316, -2.0
    %v335 = vmul.f32 %v317, -2.0
    %v336 = vmul.f32 %v332, %v326
    %v337 = vmul.f32 %v333, %v327
    %v338 = vmul.f32 %v334, %v328
    %v339 = vmul.f32 %v335, %v329
    %v340 = vmul.f32 %v336, %v254
    %v341 = vmul.f32 %v337, %v257
    %v342 = vmul.f32 %v338, %v260
    %v343 = vmul.f32 %v339, %v263
    %v344 = vmul.f32 %v340, %v254
    %v345 = vmul.f32 %v341, %v257
    %v346 = vmul.f32 %v342, %v260
    %v347 = vmul.f32 %v343, %v263
    %v348 = vmul.f32 %v326, %v284
    %v349 = vmul.f32 %v327, %v287
    %v350 = vmul.f32 %v328, %v290
    %v351 = vmul.f32 %v329, %v293
    %v352 = vadd.f32 %v344, %v348
    %v353 = vadd.f32 %v345, %v349
    %v354 = vadd.f32 %v346, %v350
    %v355 = vadd.f32 %v347, %v351
    %v356 = vmul.f32 %v336, %v266
    %v357 = vmul.f32 %v337, %v269
    %v358 = vmul.f32 %v338, %v272
    %v359 = vmul.f32 %v339, %v275
    %v360 = vmul.f32 %v356, %v266
    %v361 = vmul.f32 %v357, %v269
    %v362 = vmul.f32 %v358, %v272
    %v363 = vmul.f32 %v359, %v275
    %v364 = vmul.f32 %v326, %v296
    %v365 = vmul.f32 %v327, %v299
    %v366 = vmul.f32 %v328, %v302
    %v367 = vmul.f32 %v329, %v305
    %v368 = vadd.f32 %v360, %v364
    %v369 = vadd.f32 %v361, %v365
    %v370 = vadd.f32 %v362, %v366
    %v371 = vadd.f32 %v363, %v367
    %v372 = vmul.f32 %v330, %v278
    %v373 = vmul.f32 %v331, %v281
    %v374 = vperm.slane %v34, 6
    %v375 = vmul.f32 %v318, %v374
    %v376 = vmul.f32 %v319, %v374
    %v377 = vmul.f32 %v372, %v374
    %v378 = vmul.f32 %v373, %v374
    %v379 = vmul.f32 %v352, %v374
    %v380 = vmul.f32 %v353, %v374
    %v381 = vmul.f32 %v354, %v374
    %v382 = vmul.f32 %v355, %v374
    %v383 = vmul.f32 %v368, %v374
    %v384 = vmul.f32 %v369, %v374
    %v385 = vmul.f32 %v370, %v374
    %v386 = vmul.f32 %v371, %v374
    %v387 = vsel %vm145, %v375, 0.0
    %388 = vadd.xlane.f32.xlu0 %v387
    %v389 = vpop.xlane.xlu0 %388
    %v390 = vsel %vm145, %v376, 0.0
    %391 = vadd.xlane.f32.xlu0 %v390
    %v392 = vpop.xlane.xlu0 %391
    %v393 = vsel %vm145, %v377, 0.0
    %394 = vadd.xlane.f32.xlu0 %v393
    %v395 = vpop.xlane.xlu0 %394
    %v396 = vsel %vm145, %v378, 0.0
    %397 = vadd.xlane.f32.xlu0 %v396
    %v398 = vpop.xlane.xlu0 %397
    %v399 = vsel %vm145, %v379, 0.0
    %400 = vadd.xlane.f32.xlu0 %v399
    %v401 = vpop.xlane.xlu0 %400
    %v402 = vsel %vm145, %v380, 0.0
    %403 = vadd.xlane.f32.xlu0 %v402
    %v404 = vpop.xlane.xlu0 %403
    %v405 = vsel %vm145, %v381, 0.0
    %406 = vadd.xlane.f32.xlu0 %v405
    %v407 = vpop.xlane.xlu0 %406
    %v408 = vsel %vm145, %v382, 0.0
    %409 = vadd.xlane.f32.xlu0 %v408
    %v410 = vpop.xlane.xlu0 %409
    %v411 = vsel %vm145, %v383, 0.0
    %412 = vadd.xlane.f32.xlu0 %v411
    %v413 = vpop.xlane.xlu0 %412
    %v414 = vsel %vm145, %v384, 0.0
    %415 = vadd.xlane.f32.xlu0 %v414
    %v416 = vpop.xlane.xlu0 %415
    %v417 = vsel %vm145, %v385, 0.0
    %418 = vadd.xlane.f32.xlu0 %v417
    %v419 = vpop.xlane.xlu0 %418
    %v420 = vsel %vm145, %v386, 0.0
    %421 = vadd.xlane.f32.xlu0 %v420
    %v422 = vpop.xlane.xlu0 %421
    %v423 = vstv %s40
    %v424 = vadd.f32 %v389, %v423
    %v425 = vadd.f32 %v392, %v423
    %s426 = smul.f32 %s39, %s39
    %v427 = vstv %s426
    %v428 = vmul.f32 %v427, %v401
    %v429 = vmul.f32 %v427, %v404
    %v430 = vmul.f32 %v427, %v407
    %v431 = vmul.f32 %v427, %v410
    %v432 = vsub.f32 %v413, %v428
    %v433 = vsub.f32 %v416, %v429
    %v434 = vsub.f32 %v419, %v430
    %v435 = vsub.f32 %v422, %v431
    %v436 = vsub.f32 %v432, %v28
    %v437 = vsub.f32 %v433, %v29
    %v438 = vsub.f32 %v434, %v30
    %v439 = vsub.f32 %v435, %v31
    %v440 = vsub.f32 %v424, %v32
    %v441 = vsub.f32 %v425, %v33
    %v442 = vmul.f32 %v440, %v440
    %v443 = vmul.f32 %v441, %v441
    %446 = vrot.lane.b32.xlu0 %v442, 126
    %v447 = vpop.permute.xlu0 %446
    %448 = vrot.lane.b32.xlu0 %v443, 126
    %v449 = vpop.permute.xlu0 %448
    %vm452 = vcmask 7168
    %v453 = vsel %vm452, %v447, 0.0
    %v454 = vsel %vm452, %v449, 0.0
    %v455 = vadd.f32 %v453, %v454
    %456 = vadd.xlane.f32.xlu0 %v455
    %v457 = vpop.xlane.xlu0 %456
    %v458 = vrot.slane %v457, 4
    %v459 = vadd.f32 %v457, %v458
    %v460 = vrot.slane %v459, 2
    %v461 = vadd.f32 %v459, %v460
    %v462 = vrot.slane %v461, 1
    %v463 = vadd.f32 %v461, %v462
    %s464 = vtos %v463
    %s465 = smul.f32 %s464, 0.03125
    %s466 = scalar_lea.smem [#allocation5], 0
    %467 = sst [smem:[%s466]] %s465
    %v468 = vsub.f32 %v395, %v32
    %v469 = vsub.f32 %v398, %v33
    %v470 = vmul.f32 %v468, %v468
    %v471 = vmul.f32 %v469, %v469
    %474 = vrot.lane.b32.xlu0 %v470, 125
    %v475 = vpop.permute.xlu0 %474
    %476 = vrot.lane.b32.xlu0 %v471, 125
    %v477 = vpop.permute.xlu0 %476
    %v480 = vsel %vm452, %v475, 0.0
    %v481 = vsel %vm452, %v477, 0.0
    %v482 = vadd.f32 %v480, %v481
    %483 = vadd.xlane.f32.xlu0 %v482
    %v484 = vpop.xlane.xlu0 %483
    %v485 = vrot.slane %v484, 4
    %v486 = vadd.f32 %v484, %v485
    %v487 = vrot.slane %v486, 2
    %v488 = vadd.f32 %v486, %v487
    %v489 = vrot.slane %v488, 1
    %v490 = vadd.f32 %v488, %v489
    %s491 = vtos %v490
    %s492 = smul.f32 %s491, 0.03125
    %s493 = scalar_lea.smem [#allocation5], 1
    %494 = sst [smem:[%s493]] %s492
    %v495 = vmul.f32 %v436, %v436
    %v496 = vmul.f32 %v437, %v437
    %v497 = vmul.f32 %v438, %v438
    %v498 = vmul.f32 %v439, %v439
    %503 = vrot.lane.b32.xlu0 %v495, 126
    %v504 = vpop.permute.xlu0 %503
    %505 = vrot.lane.b32.xlu0 %v496, 126
    %v506 = vpop.permute.xlu0 %505
    %507 = vrot.lane.b32.xlu0 %v497, 126
    %v508 = vpop.permute.xlu0 %507
    %509 = vrot.lane.b32.xlu0 %v498, 126
    %v510 = vpop.permute.xlu0 %509
    %v515 = vsel %vm452, %v504, 0.0
    %v516 = vsel %vm452, %v506, 0.0
    %v517 = vadd.f32 %v515, %v516
    %v518 = vsel %vm452, %v508, 0.0
    %v519 = vadd.f32 %v517, %v518
    %v520 = vsel %vm452, %v510, 0.0
    %v521 = vadd.f32 %v519, %v520
    %522 = vadd.xlane.f32.xlu0 %v521
    %v523 = vpop.xlane.xlu0 %522
    %v524 = vrot.slane %v523, 4
    %v525 = vadd.f32 %v523, %v524
    %v526 = vrot.slane %v525, 2
    %v527 = vadd.f32 %v525, %v526
    %v528 = vrot.slane %v527, 1
    %v529 = vadd.f32 %v527, %v528
    %s530 = vtos %v529
    %s531 = smul.f32 %s530, 0.015625
    %s532 = scalar_lea.smem [#allocation5], 2
    %533 = sst [smem:[%s532]] %s531
    // Predicated region
    $region18: #{wave_equation_pinn_forward.1} parent=1 // pred_check
      _
    $region19: #{wave_equation_pinn_forward.1} parent=1 // pred_check_branch
      %535 = sbr.rel (0) target = $region21
    $region20: #{wave_equation_pinn_forward.1} parent=1 // pred_region
      %537 = vsyncadd [#allocation4], 0
      %s539 = sshll.u32 %s3, 4
      %s540 = int_to_ptr.vmem [resolvable:$true] %s539
      %542 = dma.smem_to_vmem [#allocation5], 16, %s540, [#allocation4]
    $region21: #{wave_equation_pinn_forward.1} parent=1 // pred_fallthru
      _
    // Predicated region
    $region22: #{wave_equation_pinn_forward.1} parent=1 // pred_check
      _
    $region23: #{wave_equation_pinn_forward.1} parent=1 // pred_check_branch
      %544 = sbr.rel (0) target = $region25
    $region24: #{wave_equation_pinn_forward.1} parent=1 // pred_region
      %546 = dma.done [#allocation4], 16
    $region25: #{wave_equation_pinn_forward.1} parent=1 // pred_fallthru
      _
    %547 = sfence
    %548 = vsyncpa [#allocation3], 1
    %549 = vsyncpa [#allocation4], 1

</llo_original>
